<compile_context>
chip_gen: v6e
topology: v6e:2x2x1
jax: 0.10.0
libtpu: 0.0.40
codegen_flags: <defaults>
</compile_context>

<pallas_src>
import functools

import jax
import jax.numpy as jnp
from jax.experimental import pallas as pl
from jax.experimental.pallas import tpu as pltpu


_BLOCK_BYTES_TARGET = 4 * 1024 * 1024   # ~4 MiB per input block (roofline sweet spot)
_HW_TILE_CAP = 4096


def _round_up(x, m):
    return ((x + m - 1) // m) * m


def _cdiv(a, b):
    return -(-a // b)


# --------------------------------------------------------------------------
# Tile selection helpers (host-side, shapes are static under jit).
# --------------------------------------------------------------------------
def _pick_hw_tile(hw, cap=_HW_TILE_CAP):
    """Pick the HW (reduction) tile. Prefer an exact multiple-of-128 divisor of
    HW (no masking needed); otherwise use a rounded-up tile + in-kernel mask."""
    cap = max(128, (min(cap, _round_up(hw, 128)) // 128) * 128)
    if hw % 128 == 0 and hw <= cap:
        return hw, False
    best_div = 0
    if hw % 128 == 0:
        t = cap
        while t >= 128:
            if hw % t == 0:
                best_div = t
                break
            t -= 128
    mask_tile = min(cap, _round_up(hw, 128))
    if best_div >= mask_tile // 2:       # exact tiling, not much smaller -> no mask
        return best_div, False
    return mask_tile, True


def _pick_rows_tile(rows, granule, max_rows):
    """Pick the rows (B*J) tile: powers-of-two multiples of the sublane-packing
    granule, capped by the VMEM budget.  Prefer an even (>=2) number of row
    tiles so the 'parallel' rows axis shards evenly across v7x's two
    TensorCores, but never shrink the tile by more than 2x for that."""
    if rows <= granule:
        return granule
    limit = min(max(max_rows, granule), _round_up(rows, granule))
    cands = []
    c = granule
    while c <= limit:
        cands.append(c)
        c *= 2
    if not cands:
        return granule
    cands = cands[::-1]                  # largest first
    largest = cands[0]
    for c in cands:
        n = _cdiv(rows, c)
        if n >= 2 and n % 2 == 0 and c >= largest // 2:
            return c
    return largest


# --------------------------------------------------------------------------
# Stage A kernel: per-row sum of squared differences, tiled over (rows, HW).
# --------------------------------------------------------------------------
def _row_sumsq_kernel(pred_ref, gt_ref, out_ref, acc_ref, *, hw, hw_tile, needs_mask):
    k = pl.program_id(1)

    @pl.when(k == 0)
    def _():
        acc_ref[...] = jnp.zeros_like(acc_ref)

    # Cast after load: HBM traffic stays at the input's native width.
    d = pred_ref[...].astype(jnp.float32) - gt_ref[...].astype(jnp.float32)
    if needs_mask:
        # Zero out-of-range lanes of the (possibly partial) last HW block so
        # garbage from the ragged DMA never reaches the row sums.
        col = k * hw_tile + jax.lax.broadcasted_iota(jnp.int32, d.shape, 1)
        d = jnp.where(col < hw, d, 0.0)
    sq = d * d

    # Lane-dense partial accumulation: fold the hw_tile lanes into one 128-wide
    # slab with lane-aligned VPU adds (no relayout); defer the cross-lane (XLU)
    # reduce and the narrow (rows,1) store to the final reduction step.
    part = sq[:, 0:128]
    for off in range(128, hw_tile, 128):
        part = part + sq[:, off:off + 128]
    acc_ref[...] += part

    @pl.when(k == pl.num_programs(1) - 1)
    def _():
        out_ref[...] = jnp.sum(acc_ref[...], axis=-1, keepdims=True)


# --------------------------------------------------------------------------
# Public entry point.
# --------------------------------------------------------------------------
@functools.partial(jax.jit, static_argnames=("use_target_weight", "topk"))
def joints_ohkm_mse_loss(output, target, target_weight,
                         use_target_weight=True, topk=8):
    """output/target: (B, J, H, W); target_weight: (B, J, 1). Returns scalar."""
    B, J, H, W = output.shape
    HW = H * W
    R = B * J
    assert topk <= J, "topk must be <= num_joints (torch.topk would raise)"

    pred = output.reshape(R, HW)    # keep native dtype; cast happens in-kernel
    gt = target.reshape(R, HW)

    itemsize = jnp.dtype(pred.dtype).itemsize
    granule = max(8, 32 // itemsize)              # 8 f32 / 16 bf16 / 32 int8-fp8

    hw_tile, needs_mask = _pick_hw_tile(HW)
    max_rows = max(granule,
                   ((_BLOCK_BYTES_TARGET // (hw_tile * itemsize)) // granule) * granule)
    rows_tile = _pick_rows_tile(R, granule, max_rows)

    row_grid = _cdiv(R, rows_tile)
    hw_grid = _cdiv(HW, hw_tile)

    # VMEM budget: 2 inputs x double-buffer + f32 elementwise temporaries
    # headroom + lane-dense accumulator scratch + slack.  Clamped well below
    # v7x's 64 MiB physical VMEM.
    vmem_bytes = (4 * rows_tile * hw_tile * itemsize
                  + 2 * rows_tile * hw_tile * 4
                  + rows_tile * 128 * 4
                  + (8 << 20))
    vmem_limit = int(min(56 << 20, max(24 << 20, vmem_bytes)))

    cost = pl.CostEstimate(
        flops=3 * R * HW,
        transcendentals=0,
        bytes_accessed=2 * R * HW * itemsize + R * 4,   # exact (no padding) traffic
    )

    kernel = functools.partial(
        _row_sumsq_kernel, hw=HW, hw_tile=hw_tile, needs_mask=needs_mask)

    row_sums = pl.pallas_call(
        kernel,
        out_shape=jax.ShapeDtypeStruct((R, 1), jnp.float32),
        grid=(row_grid, hw_grid),                        # reduction axis last
        in_specs=[
            pl.BlockSpec((rows_tile, hw_tile), lambda i, k: (i, k)),
            pl.BlockSpec((rows_tile, hw_tile), lambda i, k: (i, k)),
        ],
        out_specs=pl.BlockSpec((rows_tile, 1), lambda i, k: (i, 0)),
        scratch_shapes=[pltpu.VMEM((rows_tile, 128), jnp.float32)],
        compiler_params=pltpu.CompilerParams(
            dimension_semantics=("parallel", "arbitrary"),
            vmem_limit_bytes=vmem_limit),
        cost_estimate=cost,
    )(pred, gt)

    # Finalize: a few-KB (B, J) problem, fused by XLA inside this jit
    # (per review: cheaper than a second pallas_call + slice/reshape dispatch).
    sums = row_sums.reshape(B, J)
    if use_target_weight:
        w = target_weight.reshape(B, J).astype(jnp.float32)
        sums = sums * (w * w)               # (w*p - w*g)^2 == w^2 * (p-g)^2
    loss = (0.5 / float(HW)) * sums         # 0.5 * mean over HW
    topk_vals = jax.lax.top_k(loss, topk)[0]           # == torch.topk value sum
    return jnp.mean(jnp.sum(topk_vals, axis=-1) / float(topk))


# --------------------------------------------------------------------------
# Pure-JAX reference (mirrors the PyTorch forward) for verification.
# --------------------------------------------------------------------------
def _reference(output, target, target_weight, *, use_target_weight=True, topk=8):
    B, J, H, W = output.shape
    pred = output.reshape(B, J, -1).astype(jnp.float32)
    gt = target.reshape(B, J, -1).astype(jnp.float32)
    w = target_weight.reshape(B, J, 1).astype(jnp.float32)
    if use_target_weight:
        diff = pred * w - gt * w
    else:
        diff = pred - gt
    loss = 0.5 * jnp.mean(diff * diff, axis=-1)          # (B, J)
    topk_vals, _ = jax.lax.top_k(loss, topk)             # (B, k)
    return jnp.mean(jnp.sum(topk_vals, axis=-1) / topk)


if __name__ == "__main__":
    key = jax.random.PRNGKey(0)

    # Case 1: aligned shapes (HW multiple of 128), both weight modes.
    B, J, H, W = 2, 16, 16, 16
    k1, k2, k3, key = jax.random.split(key, 4)
    output = jax.random.normal(k1, (B, J, H, W), dtype=jnp.float32)
    target = jax.random.normal(k2, (B, J, H, W), dtype=jnp.float32)
    target_weight = jax.random.uniform(k3, (B, J, 1), dtype=jnp.float32)
    for use_tw in (True, False):
        got = jax.block_until_ready(
            joints_ohkm_mse_loss(output, target, target_weight,
                                 use_target_weight=use_tw, topk=8))
        ref = jax.block_until_ready(
            _reference(output, target, target_weight,
                       use_target_weight=use_tw, topk=8))
        assert jnp.allclose(got, ref, atol=1e-5, rtol=1e-5), (use_tw, got, ref)

    # Case 2: ragged rows (B*J not a tile multiple) + HW not a multiple of 128
    # (exercises partial blocks and the in-kernel lane mask).
    B, J, H, W = 3, 5, 9, 9
    k1, k2, k3, key = jax.random.split(key, 4)
    output = jax.random.normal(k1, (B, J, H, W), dtype=jnp.float32)
    target = jax.random.normal(k2, (B, J, H, W), dtype=jnp.float32)
    target_weight = jax.random.uniform(k3, (B, J, 1), dtype=jnp.float32)
    got = jax.block_until_ready(
        joints_ohkm_mse_loss(output, target, target_weight,
                             use_target_weight=True, topk=4))
    ref = jax.block_until_ready(
        _reference(output, target, target_weight, use_target_weight=True, topk=4))
    assert jnp.allclose(got, ref, atol=1e-5, rtol=1e-5), (got, ref)

    print("KERNEL_OK")
</pallas_src>

<mosaic_0001>
module attributes {stable_mosaic.version = 11 : i64} {
  func.func @_row_sumsq_kernel(%arg0: i32, %arg1: i32, %arg2: memref<16x256xf32, #tpu.memory_space<vmem>>, %arg3: memref<16x256xf32, #tpu.memory_space<vmem>>, %arg4: memref<16x1xf32, #tpu.memory_space<vmem>>, %arg5: memref<16x128xf32, #tpu.memory_space<vmem>>) attributes {dimension_semantics = [#tpu.dimension_semantics<parallel>, #tpu.dimension_semantics<arbitrary>], iteration_bounds = array<i64: 2, 1>, scalar_prefetch = 0 : i64, scratch_operands = 1 : i64, tpu.core_type = #tpu.core_type<tc>, window_params = [{transform_indices = @transform_0, window_bounds = array<i64: 16, 256>}, {transform_indices = @transform_1, window_bounds = array<i64: 16, 256>}, {transform_indices = @transform_2, window_bounds = array<i64: 16, 1>}]} {
    %c0_i32 = arith.constant 0 : i32
    %0 = arith.cmpi eq, %arg1, %c0_i32 : i32
    %1 = arith.extui %0 : i1 to i32
    %c0_i32_0 = arith.constant 0 : i32
    %2 = arith.cmpi ne, %1, %c0_i32_0 : i32
    scf.if %2 {
      %cst = arith.constant 0.000000e+00 : f32
      %16 = vector.broadcast %cst : f32 to vector<16x128xf32>
      %c0_10 = arith.constant 0 : index
      %c0_11 = arith.constant 0 : index
      %17 = vector.load %arg5[%c0_10, %c0_11] : memref<16x128xf32, #tpu.memory_space<vmem>>, vector<16x128xf32>
      tpu.vector_store %arg5[%c0_10, %c0_11], %16 {strides = array<i32>} : memref<16x128xf32, #tpu.memory_space<vmem>>, vector<16x128xf32>,
    } else {
    }
    %c0 = arith.constant 0 : index
    %c0_1 = arith.constant 0 : index
    %3 = vector.load %arg2[%c0, %c0_1] : memref<16x256xf32, #tpu.memory_space<vmem>>, vector<16x256xf32>
    %c0_2 = arith.constant 0 : index
    %c0_3 = arith.constant 0 : index
    %4 = vector.load %arg3[%c0_2, %c0_3] : memref<16x256xf32, #tpu.memory_space<vmem>>, vector<16x256xf32>
    %5 = arith.subf %3, %4 : vector<16x256xf32>
    %6 = arith.mulf %5, %5 : vector<16x256xf32>
    %7 = vector.extract_strided_slice %6 {offsets = [0, 0], sizes = [16, 128], strides = [1, 1]} : vector<16x256xf32> to vector<16x128xf32>
    %8 = vector.extract_strided_slice %6 {offsets = [0, 128], sizes = [16, 128], strides = [1, 1]} : vector<16x256xf32> to vector<16x128xf32>
    %9 = arith.addf %7, %8 : vector<16x128xf32>
    %c0_4 = arith.constant 0 : index
    %c0_5 = arith.constant 0 : index
    %10 = vector.load %arg5[%c0_4, %c0_5] : memref<16x128xf32, #tpu.memory_space<vmem>>, vector<16x128xf32>
    %11 = arith.addf %10, %9 : vector<16x128xf32>
    %c0_6 = arith.constant 0 : index
    %c0_7 = arith.constant 0 : index
    %12 = vector.load %arg5[%c0_6, %c0_7] : memref<16x128xf32, #tpu.memory_space<vmem>>, vector<16x128xf32>
    tpu.vector_store %arg5[%c0_6, %c0_7], %11 {strides = array<i32>} : memref<16x128xf32, #tpu.memory_space<vmem>>, vector<16x128xf32>,
    %c0_i32_8 = arith.constant 0 : i32
    %13 = arith.cmpi eq, %arg1, %c0_i32_8 : i32
    %14 = arith.extui %13 : i1 to i32
    %c0_i32_9 = arith.constant 0 : i32
    %15 = arith.cmpi ne, %14, %c0_i32_9 : i32
    scf.if %15 {
      %c0_10 = arith.constant 0 : index
      %c0_11 = arith.constant 0 : index
      %16 = vector.load %arg5[%c0_10, %c0_11] : memref<16x128xf32, #tpu.memory_space<vmem>>, vector<16x128xf32>
      %cst = arith.constant dense<0.000000e+00> : vector<16xf32>
      %17 = vector.multi_reduction <add>, %16, %cst [1] : vector<16x128xf32> to vector<16xf32>
      %18 = vector.shape_cast %17 : vector<16xf32> to vector<16x1xf32>
      %c0_12 = arith.constant 0 : index
      %c0_13 = arith.constant 0 : index
      %19 = vector.load %arg4[%c0_12, %c0_13] : memref<16x1xf32, #tpu.memory_space<vmem>>, vector<16x1xf32>
      tpu.vector_store %arg4[%c0_12, %c0_13], %18 {strides = array<i32>} : memref<16x1xf32, #tpu.memory_space<vmem>>, vector<16x1xf32>,
    } else {
    }
    return
  }
  func.func @transform_0(%arg0: i32, %arg1: i32) -> (i32, i32) {
    %c0_i32 = arith.constant 0 : i32
    return %arg0, %arg1 : i32, i32
  }
  func.func @transform_1(%arg0: i32, %arg1: i32) -> (i32, i32) {
    %c0_i32 = arith.constant 0 : i32
    return %arg0, %arg1 : i32, i32
  }
  func.func @transform_2(%arg0: i32, %arg1: i32) -> (i32, i32) {
    %c0_i32 = arith.constant 0 : i32
    %c0_i32_0 = arith.constant 0 : i32
    return %arg0, %c0_i32 : i32, i32
  }
}

</mosaic_0001>

<llo_original>
// kernel: mul.0
$region0: #{mul.0}
  #allocation0 [shape = 's32[1]{0}', space=sflag, size = 0x4, scoped, tag = 'scoped memory for mul.0']
  %s0 = inlined_call_operand.vmem [shape: f32[2,16,1], index: 0, kind: input, shape index: {}, may-alias: {0,1}]
  %s1 = inlined_call_operand.vmem [shape: f32[2,16,1], index: 1, kind: input, shape index: {}, may-alias: {0,1}]
  %s2 = inlined_call_operand.vmem [shape: f32[2,16,1], index: 2, kind: output, shape index: {}]
  %v3 = vld [vmem:[%s0] sm:$0x1]
  %v4 = vld [vmem:[%s1] sm:$0x1]
  %5 = xla_tuple %v3, %v4
  %6 = xla_tuple %5
  %v7 = vmul.f32 %v3, %v4
  %8 = xla_tuple %v7
  %9 = vst [vmem:[%s2] sm:$0x1] %v7
  %s10 = scalar_lea.vmem %s0, 1
  %v11 = vld [vmem:[%s10] sm:$0x1]
  %s12 = scalar_lea.vmem %s1, 1
  %v13 = vld [vmem:[%s12] sm:$0x1]
  %14 = xla_tuple %v11, %v13
  %15 = xla_tuple %14
  %v16 = vmul.f32 %v11, %v13
  %17 = xla_tuple %v16
  %s18 = scalar_lea.vmem %s2, 1
  %19 = vst [vmem:[%s18] sm:$0x1] %v16

// kernel: joints_ohkm_mse_loss.1
$region0: #{joints_ohkm_mse_loss.1}
  #allocation0 [shape = 'u32[]', space=smem, size = 0x4, offset = 0x4, fixed_abs, tag = 'smem constant byte address 0x4 - core index']
  #allocation1 [shape = 'u32[144,128]{1,0:T(1,128)}', space=vmem, size = 0x12000, scoped, tag = 'internal scratch']
  #allocation2 [shape = 'f32[16,128]{1,0:T(8,128)}', space=vmem, size = 0x2000, scoped, tag = 'scratch operand']
  %s0 = inlined_call_operand.vmem [shape: f32[32,256], index: 0, kind: input, shape index: {}]
  %s1 = inlined_call_operand.vmem [shape: f32[32,256], index: 1, kind: input, shape index: {}]
  %s2 = inlined_call_operand.vmem [shape: f32[32,1], index: 2, kind: output, shape index: {}]
  %s3 = sld [smem:[#allocation0]]
  $region49: #{joints_ohkm_mse_loss.1} parent=0
    _
  %s5 = ssub.s32 1, %s3
  %s6 = scalar_select 0, %s5, %s3
  loop: start=0, step=1, limit=4
  $region2: #{joints_ohkm_mse_loss.1} parent=0 // loop_pre_header
    _
  $region3: #{joints_ohkm_mse_loss.1} parent=0 // loop_header
    %s8 = sphi 0, %s12
    %p9 = scmp.ge.s32.totalorder %s8, 4
    %s15 = sphi 0, %s27
    %s16 = sphi 0, %s23
    %s17 = sphi 0, %s15
    %s18 = sphi 0, %s16
    %s19 = sphi 0, %s17
    %s20 = sphi 0, %s18
    %s32 = sphi 0, %s34
    %s35 = sphi 0, %s32
    %s36 = sphi 0, %s35
    %s52 = sphi 0, %s36
    %s60 = sphi 0, %s62
    %s63 = sphi 0, %s60
    %s64 = sphi 0, %s63
    %s80 = sphi 0, %s64
    %s86 = sphi 0, %s88
    %s89 = sphi 0, %s86
    %s90 = sphi 0, %s89
    %s106 = sphi 0, %s90
  $region4: #{joints_ohkm_mse_loss.1} parent=0 // loop_header_branch
    %11 = sbr.rel (%p9) target = $region8
  $region5: #{joints_ohkm_mse_loss.1} parent=0 // loop_body
    %s13 = ssub.s32 %s8, 1
    %s14 = ssub.s32 %s8, 2
    %s21 = sadd.s32 1, %s16
    %p22 = scmp.ge.s32.totalorder %s21, 1
    %s23 = scalar_select %p22, 0, %s21
    %s24 = sadd.s32 1, %s15
    %s25 = scalar_select %p22, %s24, %s15
    %p26 = scmp.ge.s32.totalorder %s25, 2
    %s27 = scalar_select %p26, 0, %s25
    %s28 = ssub.s32 %s15, %s27
    %s29 = ssub.s32 %s16, %s23
    %s30 = sor.u32 %s28, %s29
    %p31 = scmp.eq.s32.totalorder %s30, 0
    %s33 = sadd.s32 %s32, 1
    %s34 = scalar_select %p31, %s32, %s33
    %p37 = pneg %p31
    %p38 = scmp.eq.s32.totalorder %s8, 1
    %p39 = por %p37, %p38
    %p40 = scmp.ne.s32.totalorder %s32, %s35
    %p41 = scmp.eq.s32.totalorder %s8, 0
    %p42 = por %p40, %p41
    %p43 = scmp.ne.s32.totalorder %s32, %s35
    %p44 = scmp.eq.s32.totalorder %s13, 1
    %p45 = por %p43, %p44
    %p46 = scmp.ne.s32.totalorder %s35, %s36
    %p47 = scmp.eq.s32.totalorder %s13, 0
    %p48 = por %p46, %p47
    %p49 = scmp.ne.s32.totalorder %s35, %s36
    %p50 = scmp.eq.s32.totalorder %s14, 1
    %p51 = por %p49, %p50
    %p53 = scmp.ne.s32.totalorder %s36, %s52
    %p54 = scmp.eq.s32.totalorder %s14, 0
    %p55 = por %p53, %p54
    %s56 = ssub.s32 %s15, %s27
    %s57 = ssub.s32 %s16, %s23
    %s58 = sor.u32 %s56, %s57
    %p59 = scmp.eq.s32.totalorder %s58, 0
    %s61 = sadd.s32 %s60, 1
    %s62 = scalar_select %p59, %s60, %s61
    %p65 = pneg %p59
    %p66 = scmp.eq.s32.totalorder %s8, 1
    %p67 = por %p65, %p66
    %p68 = scmp.ne.s32.totalorder %s60, %s63
    %p69 = scmp.eq.s32.totalorder %s8, 0
    %p70 = por %p68, %p69
    %p71 = scmp.ne.s32.totalorder %s60, %s63
    %p72 = scmp.eq.s32.totalorder %s13, 1
    %p73 = por %p71, %p72
    %p74 = scmp.ne.s32.totalorder %s63, %s64
    %p75 = scmp.eq.s32.totalorder %s13, 0
    %p76 = por %p74, %p75
    %p77 = scmp.ne.s32.totalorder %s63, %s64
    %p78 = scmp.eq.s32.totalorder %s14, 1
    %p79 = por %p77, %p78
    %p81 = scmp.ne.s32.totalorder %s64, %s80
    %p82 = scmp.eq.s32.totalorder %s14, 0
    %p83 = por %p81, %p82
    %s84 = ssub.s32 %s15, %s27
    %p85 = scmp.eq.s32.totalorder %s84, 0
    %s87 = sadd.s32 %s86, 1
    %s88 = scalar_select %p85, %s86, %s87
    %p91 = pneg %p85
    %p92 = scmp.eq.s32.totalorder %s8, 1
    %p93 = por %p91, %p92
    %p94 = scmp.ne.s32.totalorder %s86, %s89
    %p95 = scmp.eq.s32.totalorder %s8, 0
    %p96 = por %p94, %p95
    %p97 = scmp.ne.s32.totalorder %s86, %s89
    %p98 = scmp.eq.s32.totalorder %s13, 1
    %p99 = por %p97, %p98
    %p100 = scmp.ne.s32.totalorder %s89, %s90
    %p101 = scmp.eq.s32.totalorder %s13, 0
    %p102 = por %p100, %p101
    %p103 = scmp.ne.s32.totalorder %s89, %s90
    %p104 = scmp.eq.s32.totalorder %s14, 1
    %p105 = por %p103, %p104
    %p107 = scmp.ne.s32.totalorder %s90, %s106
    %p108 = scmp.eq.s32.totalorder %s14, 0
    %p109 = por %p107, %p108
    %p110 = scmp.le.s32.totalorder 1, %s8
    %p111 = scmp.lt.s32.totalorder %s8, 3
    %p112 = pnand %p110, %p111
    %p113 = pneg %p112
    // Predicated region
    $region9: #{joints_ohkm_mse_loss.1} parent=5 // pred_check
      _
    $region10: #{joints_ohkm_mse_loss.1} parent=5 // pred_check_branch
      %115 = sbr.rel (%p112) target = $region12
    $region11: #{joints_ohkm_mse_loss.1} parent=5 // pred_region
      %s116 = ssub.s32 %s8, 1
    $region12: #{joints_ohkm_mse_loss.1} parent=5 // pred_fallthru
      _
    %p117 = scmp.lt.s32.totalorder %s8, 2
    // Predicated region
    $region13: #{joints_ohkm_mse_loss.1} parent=5 // pred_check
      %p118 = pneg %p117
    $region14: #{joints_ohkm_mse_loss.1} parent=5 // pred_check_branch
      %120 = sbr.rel (%p118) target = $region16
    $region15: #{joints_ohkm_mse_loss.1} parent=5 // pred_region
      // Predicated region
      $region17: #{joints_ohkm_mse_loss.1} parent=15 // pred_check
        %p121 = pneg %p42
      $region18: #{joints_ohkm_mse_loss.1} parent=15 // pred_check_branch
        %123 = sbr.rel (%p121) target = $region20
      $region19: #{joints_ohkm_mse_loss.1} parent=15 // pred_region
        %s124 = smul.u32 2, %s15
        %s125 = smul.u32 2, %s16
        %p126 = scmp.lt.s32.totalorder %s124, 3
        %s127 = scalar_select %p126, %s124, 3
        %p128 = scmp.lt.s32.totalorder %s125, 1
        %s129 = scalar_select %p128, %s125, 1
        %s130 = smul.addr %s127, 2
        %s131 = sadd.s32 %s129, %s130
        %s132 = smul.addr %s131, 8
        %s133 = scalar_lea.vmem %s0, %s132
        %s134 = smul.u32 2, %s15
        %s135 = smul.u32 2, %s16
      $region20: #{joints_ohkm_mse_loss.1} parent=15 // pred_fallthru
        _
      // Predicated region
      $region21: #{joints_ohkm_mse_loss.1} parent=15 // pred_check
        %p136 = pneg %p70
      $region22: #{joints_ohkm_mse_loss.1} parent=15 // pred_check_branch
        %138 = sbr.rel (%p136) target = $region24
      $region23: #{joints_ohkm_mse_loss.1} parent=15 // pred_region
        %s139 = smul.u32 2, %s15
        %s140 = smul.u32 2, %s16
        %p141 = scmp.lt.s32.totalorder %s139, 3
        %s142 = scalar_select %p141, %s139, 3
        %p143 = scmp.lt.s32.totalorder %s140, 1
        %s144 = scalar_select %p143, %s140, 1
        %s145 = smul.addr %s142, 2
        %s146 = sadd.s32 %s144, %s145
        %s147 = smul.addr %s146, 8
        %s148 = scalar_lea.vmem %s1, %s147
        %s149 = smul.u32 2, %s15
        %s150 = smul.u32 2, %s16
      $region24: #{joints_ohkm_mse_loss.1} parent=15 // pred_fallthru
        _
    $region16: #{joints_ohkm_mse_loss.1} parent=5 // pred_fallthru
      _
    %p151 = scmp.le.s32.totalorder 1, %s8
    %p152 = scmp.lt.s32.totalorder %s8, 3
    %p153 = pnand %p151, %p152
    %p154 = pneg %p153
    // Predicated region
    $region25: #{joints_ohkm_mse_loss.1} parent=5 // pred_check
      _
    $region26: #{joints_ohkm_mse_loss.1} parent=5 // pred_check_branch
      %156 = sbr.rel (%p153) target = $region28
    $region27: #{joints_ohkm_mse_loss.1} parent=5 // pred_region
      %s157 = ssub.s32 %s8, 1
      %s158 = smul.u32 2, %s17
      %s159 = smul.u32 2, %s18
      %p160 = scmp.lt.s32.totalorder %s158, 3
      %s161 = scalar_select %p160, %s158, 3
      %p162 = scmp.lt.s32.totalorder %s159, 1
      %s163 = scalar_select %p162, %s159, 1
      %s164 = smul.addr %s161, 2
      %s165 = sadd.s32 %s163, %s164
      %s166 = smul.addr %s165, 8
      %s167 = scalar_lea.vmem %s0, %s166
      %p168 = pneg %p48
      %p169 = pneg %p45
      %s170 = smul.u32 2, %s17
      %s171 = smul.u32 2, %s18
      %p172 = scmp.lt.s32.totalorder %s170, 3
      %s173 = scalar_select %p172, %s170, 3
      %p174 = scmp.lt.s32.totalorder %s171, 1
      %s175 = scalar_select %p174, %s171, 1
      %s176 = smul.addr %s173, 2
      %s177 = sadd.s32 %s175, %s176
      %s178 = smul.addr %s177, 8
      %s179 = scalar_lea.vmem %s1, %s178
      %p180 = pneg %p76
      %p181 = pneg %p73
      %p182 = pneg %p102
      %p183 = pneg %p99
      %s184 = smul.u32 2, %s17
      %p185 = scmp.lt.s32.totalorder %s184, 3
      %s186 = scalar_select %p185, %s184, 3
      %s187 = smul.addr %s186, 8
      %s188 = scalar_lea.vmem %s2, %s187
      %s189 = smul.u32 2, %s17
      %s190 = smul.u32 2, %s18
      %p191 = scmp.lt.s32.totalorder %s189, 3
      %s192 = scalar_select %p191, %s189, 3
      %p193 = scmp.lt.s32.totalorder %s190, 1
      %s194 = scalar_select %p193, %s190, 1
      %s195 = smul.addr %s192, 2
      %s196 = sadd.s32 %s194, %s195
      %s197 = smul.addr %s196, 8
      %s198 = scalar_lea.vmem %s0, %s197
      %s199 = smul.u32 2, %s17
      %s200 = smul.u32 2, %s18
      %s201 = smul.u32 2, %s17
      %s202 = smul.u32 2, %s18
      %p203 = scmp.lt.s32.totalorder %s201, 3
      %s204 = scalar_select %p203, %s201, 3
      %p205 = scmp.lt.s32.totalorder %s202, 1
      %s206 = scalar_select %p205, %s202, 1
      %s207 = smul.addr %s204, 2
      %s208 = sadd.s32 %s206, %s207
      %s209 = smul.addr %s208, 8
      %s210 = scalar_lea.vmem %s1, %s209
      %s211 = smul.u32 2, %s17
      %s212 = smul.u32 2, %s18
      %s213 = smul.u32 2, %s17
      %p214 = scmp.lt.s32.totalorder %s213, 3
      %s215 = scalar_select %p214, %s213, 3
      %s216 = smul.addr %s215, 8
      %s217 = scalar_lea.vmem %s2, %s216
      %s218 = smul.u32 2, %s17
      %p219 = scmp.eq.s32.totalorder %s18, 0
      // Predicated region
      $region29: #{joints_ohkm_mse_loss.1} parent=27 // pred_check
        %p220 = pneg %p219
      $region30: #{joints_ohkm_mse_loss.1} parent=27 // pred_check_branch
        %222 = sbr.rel (%p220) target = $region32
      $region31: #{joints_ohkm_mse_loss.1} parent=27 // pred_region
        %223 = vst [vmem:[#allocation2] sm:$0xff] 0.0
        %224 = vst [vmem:[#allocation2 + $0x8] sm:$0xff] 0.0
      $region32: #{joints_ohkm_mse_loss.1} parent=27 // pred_fallthru
        _
      %v225 = vld [vmem:[%s198] sm:$0xff]
      %v226 = vld [vmem:[%s198 + $0x8] sm:$0xff]
      %v227 = vld [vmem:[%s198 + $0x10] sm:$0xff]
      %v228 = vld [vmem:[%s198 + $0x18] sm:$0xff]
      %v229 = vld [vmem:[%s210] sm:$0xff]
      %v230 = vld [vmem:[%s210 + $0x8] sm:$0xff]
      %v231 = vld [vmem:[%s210 + $0x10] sm:$0xff]
      %v232 = vld [vmem:[%s210 + $0x18] sm:$0xff]
      %v233 = vsub.f32 %v225, %v229
      %v234 = vsub.f32 %v226, %v230
      %v235 = vsub.f32 %v227, %v231
      %v236 = vsub.f32 %v228, %v232
      %v237 = vmul.f32 %v233, %v233
      %v238 = vmul.f32 %v234, %v234
      %v239 = vmul.f32 %v235, %v235
      %v240 = vmul.f32 %v236, %v236
      %v241 = vadd.f32 %v237, %v238
      %v242 = vadd.f32 %v239, %v240
      %v243 = vld [vmem:[#allocation2] sm:$0xff]
      %v244 = vld [vmem:[#allocation2 + $0x8] sm:$0xff]
      %v245 = vadd.f32 %v243, %v241
      %v246 = vadd.f32 %v244, %v242
      %247 = vst [vmem:[#allocation2] sm:$0xff] %v245
      %248 = vst [vmem:[#allocation2 + $0x8] sm:$0xff] %v246
      // Predicated region
      $region33: #{joints_ohkm_mse_loss.1} parent=27 // pred_check
        %p249 = pneg %p219
      $region34: #{joints_ohkm_mse_loss.1} parent=27 // pred_check_branch
        %251 = sbr.rel (%p249) target = $region36
      $region35: #{joints_ohkm_mse_loss.1} parent=27 // pred_region
        %v252 = vld [vmem:[#allocation2] sm:$0xff]
        %v253 = vld [vmem:[#allocation2 + $0x8] sm:$0xff]
        %254 = vadd.xlane.f32.xlu0 %v252
        %v255 = vpop.xlane.xlu0 %254
        %256 = vadd.xlane.f32.xlu0 %v253
        %v257 = vpop.xlane.xlu0 %256
        %vm258 = vcmask 7168
        %259 = vst.msk [vmem:[%s217] sm:$0xff] %vm258, %v255
        %260 = vst.msk [vmem:[%s217 + $0x8] sm:$0xff] %vm258, %v257
      $region36: #{joints_ohkm_mse_loss.1} parent=27 // pred_fallthru
        _
      %s261 = smul.u32 2, %s17
      %p262 = scmp.lt.s32.totalorder %s261, 3
      %s263 = scalar_select %p262, %s261, 3
      %s264 = smul.addr %s263, 8
      %s265 = scalar_lea.vmem %s2, %s264
      // Predicated region
      $region37: #{joints_ohkm_mse_loss.1} parent=27 // pred_check
        %p266 = pneg %p99
      $region38: #{joints_ohkm_mse_loss.1} parent=27 // pred_check_branch
        %268 = sbr.rel (%p266) target = $region40
      $region39: #{joints_ohkm_mse_loss.1} parent=27 // pred_region
        %s269 = smul.u32 2, %s17
      $region40: #{joints_ohkm_mse_loss.1} parent=27 // pred_fallthru
        _
    $region28: #{joints_ohkm_mse_loss.1} parent=5 // pred_fallthru
      _
    %p270 = scmp.le.s32.totalorder 2, %s8
    // Predicated region
    $region41: #{joints_ohkm_mse_loss.1} parent=5 // pred_check
      %p271 = pneg %p270
    $region42: #{joints_ohkm_mse_loss.1} parent=5 // pred_check_branch
      %273 = sbr.rel (%p271) target = $region44
    $region43: #{joints_ohkm_mse_loss.1} parent=5 // pred_region
      %s274 = ssub.s32 %s8, 2
      // Predicated region
      $region45: #{joints_ohkm_mse_loss.1} parent=43 // pred_check
        %p275 = pneg %p105
      $region46: #{joints_ohkm_mse_loss.1} parent=43 // pred_check_branch
        %277 = sbr.rel (%p275) target = $region48
      $region47: #{joints_ohkm_mse_loss.1} parent=43 // pred_region
        %s278 = smul.u32 2, %s19
        %p279 = scmp.lt.s32.totalorder %s278, 3
        %s280 = scalar_select %p279, %s278, 3
        %s281 = smul.addr %s280, 8
        %s282 = scalar_lea.vmem %s2, %s281
      $region48: #{joints_ohkm_mse_loss.1} parent=43 // pred_fallthru
        _
    $region44: #{joints_ohkm_mse_loss.1} parent=5 // pred_fallthru
      _
  $region6: #{joints_ohkm_mse_loss.1} parent=0 // loop_footer
    %s12 = sadd.s32 1, %s8
  $region7: #{joints_ohkm_mse_loss.1} parent=0 // loop_footer_branch
    %7 = sbr.rel target = $region3
  $region8: #{joints_ohkm_mse_loss.1} parent=0 // loop_exit
    _

</llo_original>
